<compile_context>
chip_gen: v6e
topology: v6e:2x2x1
jax: 0.10.0
libtpu: 0.0.40
codegen_flags: <defaults>
</compile_context>

<pallas_src>
import functools
import inspect

import jax
import jax.numpy as jnp
from jax.experimental import pallas as pl
from jax.experimental.pallas import tpu as pltpu


_HAS_PIPELINE_MODE = (
    hasattr(pl, "Buffered")
    and "pipeline_mode" in inspect.signature(pl.BlockSpec.__init__).parameters
)


def _round_up(x, m):
    return ((x + m - 1) // m) * m


def _choose_tiling(B, quantum, max_single=1024, target_tile=512):
    """Return (tile_b, Bp). Single full-extent block up to max_single rows."""
    Bq = _round_up(B, quantum)
    if Bq <= max_single:
        return Bq, Bq
    n_steps = -(-B // target_tile)                       # ceil div
    tile_b = _round_up(-(-B // n_steps), quantum)
    return tile_b, tile_b * n_steps


def _const_spec(shape):
    """BlockSpec for a block that is identical at every grid step."""
    if _HAS_PIPELINE_MODE:
        return pl.BlockSpec(shape, lambda i: (0, 0),
                            pipeline_mode=pl.Buffered(1))
    return pl.BlockSpec(shape, lambda i: (0, 0))


def actor_kernel(x_ref, w1_ref, w2_ref, wh_ref, b12_ref, bh_ref,
                 lo_ref, hi_ref, heads_ref):
    # x: (tile_b, S) compute dtype; weights compute dtype; biases/bounds f32.
    x = x_ref[...]
    b12 = b12_ref[...]                                   # (2, Hp) f32

    h1 = jnp.dot(x, w1_ref[...], preferred_element_type=jnp.float32)
    h1 = jnp.maximum(h1 + b12[0:1, :], 0.0)              # relu (f32)

    h2 = jnp.dot(h1.astype(w2_ref.dtype), w2_ref[...],
                 preferred_element_type=jnp.float32)
    h2 = jnp.maximum(h2 + b12[1:2, :], 0.0)              # relu (f32)

    # Fused heads: columns [0, A) = mean, [A, 2A) = log_std, rest = lane pad.
    heads = jnp.dot(h2.astype(wh_ref.dtype), wh_ref[...],
                    preferred_element_type=jnp.float32) + bh_ref[...]

    # Per-column clip bounds: (-big, +big) for mean columns, (-20, 2) for
    # log_std columns -> torch.clamp restricted to the log_std head.
    heads = jnp.minimum(jnp.maximum(heads, lo_ref[...]), hi_ref[...])
    heads_ref[...] = heads.astype(heads_ref.dtype)


def prepare_actor_params(params, *, compute_dtype=jnp.bfloat16):
    """Fuse heads, stack biases, lane-pad hidden dim, build clip bounds."""
    w1, b1 = params["w1"], params["b1"]
    w2, b2 = params["w2"], params["b2"]
    wm, bm = params["wm"], params["bm"]
    ws, bs = params["ws"], params["bs"]
    S, H = w1.shape
    A = wm.shape[1]
    Hp = _round_up(H, 128)        # lane-dense hidden
    Ap = _round_up(2 * A, 128)    # lane-dense fused head output

    def pad2(a, rows, cols):
        if a.shape == (rows, cols):           # skip redundant pad copies
            return a
        return jnp.pad(a, ((0, rows - a.shape[0]), (0, cols - a.shape[1])))

    big = jnp.float32(3.0e38)
    lo = jnp.full((1, Ap), -big, jnp.float32).at[0, A:2 * A].set(-20.0)
    hi = jnp.full((1, Ap), big, jnp.float32).at[0, A:2 * A].set(2.0)

    fused = dict(
        w1=pad2(w1, S, Hp).astype(compute_dtype),
        w2=pad2(w2, Hp, Hp).astype(compute_dtype),
        wh=pad2(jnp.concatenate([wm, ws], axis=1), Hp, Ap).astype(compute_dtype),
        b12=jnp.concatenate([pad2(b1, 1, Hp), pad2(b2, 1, Hp)],
                            axis=0).astype(jnp.float32),          # (2, Hp)
        bh=pad2(jnp.concatenate([bm, bs], axis=1), 1, Ap).astype(jnp.float32),
        lo=lo, hi=hi,
    )
    meta = dict(S=S, H=H, Hp=Hp, A=A, Ap=Ap)
    return fused, meta


def actor_forward(state, fused, meta, *, tile_b=None,
                  compute_dtype=jnp.bfloat16, out_dtype=jnp.float32):
    B, S = state.shape
    assert S == meta["S"]
    A, Ap, Hp = meta["A"], meta["Ap"], meta["Hp"]

    # Sublane quantum: bf16 packs 16 rows per vreg, f32 packs 8.
    quantum = 16 if jnp.dtype(compute_dtype).itemsize == 2 else 8
    if tile_b is None:
        tile_b, Bp = _choose_tiling(B, quantum)
    else:
        tile_b = _round_up(tile_b, quantum)
        Bp = _round_up(B, tile_b)

    x = state.astype(compute_dtype)
    if Bp != B:
        x = jnp.pad(x, ((0, Bp - B), (0, 0)))
    grid = (Bp // tile_b,)

    # VMEM budget: weights (+ biases/bounds), double-buffered x/out tiles,
    # f32 activations; ~30% headroom; never below the 32 MiB default.
    wb = jnp.dtype(compute_dtype).itemsize
    ob = jnp.dtype(out_dtype).itemsize
    nbuf_w = 1 if _HAS_PIPELINE_MODE else 2
    est = ((S * Hp + Hp * Hp + Hp * Ap) * wb * nbuf_w
           + (2 * Hp + 3 * Ap) * 4 * nbuf_w
           + tile_b * S * wb * 2
           + tile_b * Ap * ob * 2
           + tile_b * Hp * 4 * 3)
    vmem_limit = min(128 << 20, max(32 << 20, int(est * 1.3)))

    heads = pl.pallas_call(
        actor_kernel,
        out_shape=jax.ShapeDtypeStruct((Bp, Ap), out_dtype),
        grid_spec=pltpu.PrefetchScalarGridSpec(
            num_scalar_prefetch=0,
            grid=grid,
            in_specs=[
                pl.BlockSpec((tile_b, S), lambda i: (i, 0)),  # state tile
                _const_spec((S, Hp)),        # w1
                _const_spec((Hp, Hp)),       # w2
                _const_spec((Hp, Ap)),       # fused heads weight (mean||log_std)
                _const_spec((2, Hp)),        # stacked b1/b2
                _const_spec((1, Ap)),        # fused heads bias
                _const_spec((1, Ap)),        # clip lower bounds
                _const_spec((1, Ap)),        # clip upper bounds
            ],
            out_specs=pl.BlockSpec((tile_b, Ap), lambda i: (i, 0)),
        ),
        compiler_params=pltpu.CompilerParams(
            dimension_semantics=("parallel",),
            vmem_limit_bytes=vmem_limit),
    )(x, fused["w1"], fused["w2"], fused["wh"], fused["b12"], fused["bh"],
      fused["lo"], fused["hi"])

    mean = heads[:B, :A]
    log_std = heads[:B, A:2 * A]
    return mean, log_std


def init_actor_params(key, state_dim, action_dim, hidden_dim):
    # Deterministic synthetic init (PyTorch-style uniform fan-in bounds).
    # Weights stored as [in_features, out_features] (transposed vs PyTorch).
    ks = jax.random.split(key, 8)

    def lin(kw, kb, fan_in, fan_out):
        bound = 1.0 / jnp.sqrt(fan_in)
        w = jax.random.uniform(kw, (fan_in, fan_out), jnp.float32, -bound, bound)
        b = jax.random.uniform(kb, (1, fan_out), jnp.float32, -bound, bound)
        return w, b

    w1, b1 = lin(ks[0], ks[1], state_dim, hidden_dim)
    w2, b2 = lin(ks[2], ks[3], hidden_dim, hidden_dim)
    wm, bm = lin(ks[4], ks[5], hidden_dim, action_dim)
    ws, bs = lin(ks[6], ks[7], hidden_dim, action_dim)
    return dict(w1=w1, b1=b1, w2=w2, b2=b2, wm=wm, bm=bm, ws=ws, bs=bs)


def actor_reference(state, p):
    # Pure-JAX f32 reference of the PyTorch forward.
    h1 = jnp.maximum(state @ p["w1"] + p["b1"], 0.0)
    h2 = jnp.maximum(h1 @ p["w2"] + p["b2"], 0.0)
    mean = h2 @ p["wm"] + p["bm"]
    log_std = jnp.clip(h2 @ p["ws"] + p["bs"], -20.0, 2.0)
    return mean, log_std


if __name__ == "__main__":
    state_dim, action_dim, hidden_dim = 16, 8, 32
    batch = 19                      # deliberately odd: exercises batch padding

    key = jax.random.PRNGKey(0)
    k_params, k_state, k_state2 = jax.random.split(key, 3)
    params = init_actor_params(k_params, state_dim, action_dim, hidden_dim)
    # Scale inputs a bit so the clamp on log_std is exercised.
    state = 3.0 * jax.random.normal(k_state, (batch, state_dim), jnp.float32)

    mean_ref, log_std_ref = actor_reference(state, params)

    # 1) exact path (f32 operands, single-step grid) - tight tolerance.
    fused32, meta = prepare_actor_params(params, compute_dtype=jnp.float32)
    mean32, logstd32 = actor_forward(state, fused32, meta,
                                     compute_dtype=jnp.float32)
    jax.block_until_ready((mean32, logstd32))
    assert mean32.shape == (batch, action_dim)
    assert logstd32.shape == (batch, action_dim)
    assert jnp.allclose(mean32, mean_ref, atol=1e-5), "f32 mean mismatch"
    assert jnp.allclose(logstd32, log_std_ref, atol=1e-5), "f32 log_std mismatch"

    # 2) default fast path (bf16 matmul operands, f32 accumulation).
    fused, _ = prepare_actor_params(params)              # bf16
    mean, log_std = actor_forward(state, fused, meta)    # bf16 operands
    jax.block_until_ready((mean, log_std))
    assert jnp.allclose(mean, mean_ref, atol=0.15, rtol=0.05), "bf16 mean drift"
    assert jnp.allclose(log_std, log_std_ref, atol=0.15, rtol=0.05), \
        "bf16 log_std drift"

    # 3) multi-step grid path (explicit tile_b) - exercises the pipelined
    #    batch grid and single-buffered constant-index weight specs.
    batch2 = 64
    state2 = 3.0 * jax.random.normal(k_state2, (batch2, state_dim), jnp.float32)
    mean2_ref, log_std2_ref = actor_reference(state2, params)
    mean2, log_std2 = actor_forward(state2, fused, meta, tile_b=32)
    jax.block_until_ready((mean2, log_std2))
    assert mean2.shape == (batch2, action_dim)
    assert jnp.allclose(mean2, mean2_ref, atol=0.15, rtol=0.05), \
        "multi-step mean drift"
    assert jnp.allclose(log_std2, log_std2_ref, atol=0.15, rtol=0.05), \
        "multi-step log_std drift"

    print("KERNEL_OK")
</pallas_src>

<mosaic_0001>
module attributes {stable_mosaic.version = 11 : i64} {
  func.func @actor_kernel(%arg0: i32, %arg1: memref<24x16xf32, #tpu.memory_space<vmem>>, %arg2: memref<16x128xf32, #tpu.memory_space<vmem>>, %arg3: memref<128x128xf32, #tpu.memory_space<vmem>>, %arg4: memref<128x128xf32, #tpu.memory_space<vmem>>, %arg5: memref<2x128xf32, #tpu.memory_space<vmem>>, %arg6: memref<1x128xf32, #tpu.memory_space<vmem>>, %arg7: memref<1x128xf32, #tpu.memory_space<vmem>>, %arg8: memref<1x128xf32, #tpu.memory_space<vmem>>, %arg9: memref<24x128xf32, #tpu.memory_space<vmem>>) attributes {dimension_semantics = [#tpu.dimension_semantics<parallel>], iteration_bounds = array<i64: 1>, scalar_prefetch = 0 : i64, scratch_operands = 0 : i64, tpu.core_type = #tpu.core_type<tc>, window_params = [{transform_indices = @transform_0, window_bounds = array<i64: 24, 16>}, {pipeline_mode = #tpu.pipeline_mode<synchronous>, transform_indices = @transform_1, window_bounds = array<i64: 16, 128>}, {pipeline_mode = #tpu.pipeline_mode<synchronous>, transform_indices = @transform_2, window_bounds = array<i64: 128, 128>}, {pipeline_mode = #tpu.pipeline_mode<synchronous>, transform_indices = @transform_3, window_bounds = array<i64: 128, 128>}, {pipeline_mode = #tpu.pipeline_mode<synchronous>, transform_indices = @transform_4, window_bounds = array<i64: 2, 128>}, {pipeline_mode = #tpu.pipeline_mode<synchronous>, transform_indices = @transform_5, window_bounds = array<i64: 1, 128>}, {pipeline_mode = #tpu.pipeline_mode<synchronous>, transform_indices = @transform_6, window_bounds = array<i64: 1, 128>}, {pipeline_mode = #tpu.pipeline_mode<synchronous>, transform_indices = @transform_7, window_bounds = array<i64: 1, 128>}, {transform_indices = @transform_8, window_bounds = array<i64: 24, 128>}]} {
    %c0 = arith.constant 0 : index
    %c0_0 = arith.constant 0 : index
    %0 = vector.load %arg1[%c0, %c0_0] : memref<24x16xf32, #tpu.memory_space<vmem>>, vector<24x16xf32>
    %c0_1 = arith.constant 0 : index
    %c0_2 = arith.constant 0 : index
    %1 = vector.load %arg5[%c0_1, %c0_2] : memref<2x128xf32, #tpu.memory_space<vmem>>, vector<2x128xf32>
    %c0_3 = arith.constant 0 : index
    %c0_4 = arith.constant 0 : index
    %2 = vector.load %arg2[%c0_3, %c0_4] : memref<16x128xf32, #tpu.memory_space<vmem>>, vector<16x128xf32>
    %cst = arith.constant dense<0.000000e+00> : vector<24x128xf32>
    %3 = tpu.matmul %0, %2, %cst {dimension_numbers = #tpu.dot_dimension_numbers<[1], [0], [0], [1], [0, 0, 1, 1], [], []>} : vector<24x16xf32>, vector<16x128xf32>, vector<24x128xf32> -> vector<24x128xf32>
    %4 = vector.extract_strided_slice %1 {offsets = [0, 0], sizes = [1, 128], strides = [1, 1]} : vector<2x128xf32> to vector<1x128xf32>
    %5 = vector.broadcast %4 : vector<1x128xf32> to vector<24x128xf32>
    %6 = arith.addf %3, %5 : vector<24x128xf32>
    %cst_5 = arith.constant 0.000000e+00 : f32
    %7 = vector.broadcast %cst_5 : f32 to vector<24x128xf32>
    %8 = arith.maximumf %6, %7 : vector<24x128xf32>
    %c0_6 = arith.constant 0 : index
    %c0_7 = arith.constant 0 : index
    %9 = vector.load %arg3[%c0_6, %c0_7] : memref<128x128xf32, #tpu.memory_space<vmem>>, vector<128x128xf32>
    %cst_8 = arith.constant dense<0.000000e+00> : vector<24x128xf32>
    %10 = tpu.matmul %8, %9, %cst_8 {dimension_numbers = #tpu.dot_dimension_numbers<[1], [0], [0], [1], [0, 0, 1, 1], [], []>} : vector<24x128xf32>, vector<128x128xf32>, vector<24x128xf32> -> vector<24x128xf32>
    %11 = vector.extract_strided_slice %1 {offsets = [1, 0], sizes = [1, 128], strides = [1, 1]} : vector<2x128xf32> to vector<1x128xf32>
    %12 = vector.broadcast %11 : vector<1x128xf32> to vector<24x128xf32>
    %13 = arith.addf %10, %12 : vector<24x128xf32>
    %cst_9 = arith.constant 0.000000e+00 : f32
    %14 = vector.broadcast %cst_9 : f32 to vector<24x128xf32>
    %15 = arith.maximumf %13, %14 : vector<24x128xf32>
    %c0_10 = arith.constant 0 : index
    %c0_11 = arith.constant 0 : index
    %16 = vector.load %arg4[%c0_10, %c0_11] : memref<128x128xf32, #tpu.memory_space<vmem>>, vector<128x128xf32>
    %cst_12 = arith.constant dense<0.000000e+00> : vector<24x128xf32>
    %17 = tpu.matmul %15, %16, %cst_12 {dimension_numbers = #tpu.dot_dimension_numbers<[1], [0], [0], [1], [0, 0, 1, 1], [], []>} : vector<24x128xf32>, vector<128x128xf32>, vector<24x128xf32> -> vector<24x128xf32>
    %c0_13 = arith.constant 0 : index
    %c0_14 = arith.constant 0 : index
    %18 = vector.load %arg6[%c0_13, %c0_14] : memref<1x128xf32, #tpu.memory_space<vmem>>, vector<1x128xf32>
    %19 = vector.broadcast %18 : vector<1x128xf32> to vector<24x128xf32>
    %20 = arith.addf %17, %19 : vector<24x128xf32>
    %c0_15 = arith.constant 0 : index
    %c0_16 = arith.constant 0 : index
    %21 = vector.load %arg7[%c0_15, %c0_16] : memref<1x128xf32, #tpu.memory_space<vmem>>, vector<1x128xf32>
    %22 = vector.broadcast %21 : vector<1x128xf32> to vector<24x128xf32>
    %23 = arith.maximumf %20, %22 : vector<24x128xf32>
    %c0_17 = arith.constant 0 : index
    %c0_18 = arith.constant 0 : index
    %24 = vector.load %arg8[%c0_17, %c0_18] : memref<1x128xf32, #tpu.memory_space<vmem>>, vector<1x128xf32>
    %25 = vector.broadcast %24 : vector<1x128xf32> to vector<24x128xf32>
    %26 = arith.minimumf %23, %25 : vector<24x128xf32>
    %c0_19 = arith.constant 0 : index
    %c0_20 = arith.constant 0 : index
    %27 = vector.load %arg9[%c0_19, %c0_20] : memref<24x128xf32, #tpu.memory_space<vmem>>, vector<24x128xf32>
    tpu.vector_store %arg9[%c0_19, %c0_20], %26 {strides = array<i32>} : memref<24x128xf32, #tpu.memory_space<vmem>>, vector<24x128xf32>,
    return
  }
  func.func @transform_0(%arg0: i32) -> (i32, i32) {
    %c0_i32 = arith.constant 0 : i32
    %c0_i32_0 = arith.constant 0 : i32
    return %arg0, %c0_i32 : i32, i32
  }
  func.func @transform_1(%arg0: i32) -> (i32, i32) {
    %c0_i32 = arith.constant 0 : i32
    %c0_i32_0 = arith.constant 0 : i32
    %c0_i32_1 = arith.constant 0 : i32
    return %c0_i32, %c0_i32_0 : i32, i32
  }
  func.func @transform_2(%arg0: i32) -> (i32, i32) {
    %c0_i32 = arith.constant 0 : i32
    %c0_i32_0 = arith.constant 0 : i32
    %c0_i32_1 = arith.constant 0 : i32
    return %c0_i32, %c0_i32_0 : i32, i32
  }
  func.func @transform_3(%arg0: i32) -> (i32, i32) {
    %c0_i32 = arith.constant 0 : i32
    %c0_i32_0 = arith.constant 0 : i32
    %c0_i32_1 = arith.constant 0 : i32
    return %c0_i32, %c0_i32_0 : i32, i32
  }
  func.func @transform_4(%arg0: i32) -> (i32, i32) {
    %c0_i32 = arith.constant 0 : i32
    %c0_i32_0 = arith.constant 0 : i32
    %c0_i32_1 = arith.constant 0 : i32
    return %c0_i32, %c0_i32_0 : i32, i32
  }
  func.func @transform_5(%arg0: i32) -> (i32, i32) {
    %c0_i32 = arith.constant 0 : i32
    %c0_i32_0 = arith.constant 0 : i32
    %c0_i32_1 = arith.constant 0 : i32
    return %c0_i32, %c0_i32_0 : i32, i32
  }
  func.func @transform_6(%arg0: i32) -> (i32, i32) {
    %c0_i32 = arith.constant 0 : i32
    %c0_i32_0 = arith.constant 0 : i32
    %c0_i32_1 = arith.constant 0 : i32
    return %c0_i32, %c0_i32_0 : i32, i32
  }
  func.func @transform_7(%arg0: i32) -> (i32, i32) {
    %c0_i32 = arith.constant 0 : i32
    %c0_i32_0 = arith.constant 0 : i32
    %c0_i32_1 = arith.constant 0 : i32
    return %c0_i32, %c0_i32_0 : i32, i32
  }
  func.func @transform_8(%arg0: i32) -> (i32, i32) {
    %c0_i32 = arith.constant 0 : i32
    %c0_i32_0 = arith.constant 0 : i32
    return %arg0, %c0_i32 : i32, i32
  }
}

</mosaic_0001>

<llo_original>
// kernel: tpu_custom_call.1
$region0: #{tpu_custom_call.1}
  #allocation0 [shape = 'u32[]', space=smem, size = 0x4, offset = 0x4, fixed_abs, tag = 'smem constant byte address 0x4 - core index']
  #allocation1 [shape = 'u32[144,128]{1,0:T(1,128)}', space=vmem, size = 0x12000, scoped, tag = 'internal scratch']
  %s0 = inlined_call_operand.vmem [shape: f32[24,16], index: 0, kind: input, shape index: {}]
  %s1 = inlined_call_operand.vmem [shape: f32[16,128], index: 1, kind: input, shape index: {}]
  %s2 = inlined_call_operand.hbm [shape: f32[128,128], index: 2, kind: input, shape index: {}]
  %s3 = inlined_call_operand.hbm [shape: f32[128,128], index: 3, kind: input, shape index: {}]
  %s4 = inlined_call_operand.vmem [shape: f32[2,128], index: 4, kind: input, shape index: {}]
  %s5 = inlined_call_operand.vmem [shape: f32[1,128], index: 5, kind: input, shape index: {}]
  %s6 = inlined_call_operand.vmem [shape: f32[1,128], index: 6, kind: input, shape index: {}]
  %s7 = inlined_call_operand.vmem [shape: f32[1,128], index: 7, kind: input, shape index: {}]
  %s8 = inlined_call_operand.hbm [shape: f32[24,128], index: 8, kind: output, shape index: {}]
  %s9 = sld [smem:[#allocation0]]
  $region50: #{tpu_custom_call.1} parent=0
    _
  %s11 = ssub.s32 1, %s9
  %s12 = scalar_select 0, %s11, %s9
  $region1: #{tpu_custom_call.1} parent=0
    #allocation2 [shape = 'u8[65536]{0}', space=vmem, size = 0x10000, scoped, tag = 'input window, operand 2, single buffered']
    #allocation3 [shape = 's32[1]{0}', space=sflag, size = 0x4, scoped, tag = 'scoped memory for tpu_custom_call.1']
    #allocation4 [shape = 's32[1]{0}', space=sflag, size = 0x4, scoped, tag = 'scoped memory for tpu_custom_call.1']
    #allocation5 [shape = 'u8[65536]{0}', space=vmem, size = 0x10000, scoped, tag = 'input window, operand 3, single buffered']
    #allocation6 [shape = 's32[1]{0}', space=sflag, size = 0x4, scoped, tag = 'scoped memory for tpu_custom_call.1']
    #allocation7 [shape = 'u8[12288]{0}', space=vmem, size = 0x3000, scoped, tag = 'output window, operand 0, single buffered']
    %13 = vsyncpa [#allocation3], 0
    %14 = vsyncpa [#allocation6], 0
    %15 = vsyncpa [#allocation4], 0
    // Predicated region
    $region2: #{tpu_custom_call.1} parent=1 // pred_check
      _
    $region3: #{tpu_custom_call.1} parent=1 // pred_check_branch
      %17 = sbr.rel (0) target = $region5
    $region4: #{tpu_custom_call.1} parent=1 // pred_region
      _
    $region5: #{tpu_custom_call.1} parent=1 // pred_fallthru
      _
    // Predicated region
    $region6: #{tpu_custom_call.1} parent=1 // pred_check
      _
    $region7: #{tpu_custom_call.1} parent=1 // pred_check_branch
      %19 = sbr.rel (0) target = $region9
    $region8: #{tpu_custom_call.1} parent=1 // pred_region
      _
    $region9: #{tpu_custom_call.1} parent=1 // pred_fallthru
      _
    // Predicated region
    $region10: #{tpu_custom_call.1} parent=1 // pred_check
      _
    $region11: #{tpu_custom_call.1} parent=1 // pred_check_branch
      %21 = sbr.rel (0) target = $region13
    $region12: #{tpu_custom_call.1} parent=1 // pred_region
      %s23 = ssub.s32 2048, 2048
      %24 = vsyncadd [#allocation3], %s23
      %s25 = sshll.u32 [#allocation2], 4
      %s26 = int_to_ptr.vmem [resolvable:$true] %s25
      %31 = dma.hbm_to_vmem [thread:$0]  %s2, 2048, %s26, [#allocation3], 128, 128, 8
    $region13: #{tpu_custom_call.1} parent=1 // pred_fallthru
      _
    // Predicated region
    $region14: #{tpu_custom_call.1} parent=1 // pred_check
      _
    $region15: #{tpu_custom_call.1} parent=1 // pred_check_branch
      %33 = sbr.rel (0) target = $region17
    $region16: #{tpu_custom_call.1} parent=1 // pred_region
      %s35 = ssub.s32 2048, 2048
      %36 = vsyncadd [#allocation6], %s35
      %s37 = sshll.u32 [#allocation5], 4
      %s38 = int_to_ptr.vmem [resolvable:$true] %s37
      %43 = dma.hbm_to_vmem [thread:$0]  %s3, 2048, %s38, [#allocation6], 128, 128, 8
    $region17: #{tpu_custom_call.1} parent=1 // pred_fallthru
      _
    // Predicated region
    $region18: #{tpu_custom_call.1} parent=1 // pred_check
      _
    $region19: #{tpu_custom_call.1} parent=1 // pred_check_branch
      %45 = sbr.rel (0) target = $region21
    $region20: #{tpu_custom_call.1} parent=1 // pred_region
      _
    $region21: #{tpu_custom_call.1} parent=1 // pred_fallthru
      _
    // Predicated region
    $region22: #{tpu_custom_call.1} parent=1 // pred_check
      _
    $region23: #{tpu_custom_call.1} parent=1 // pred_check_branch
      %47 = sbr.rel (0) target = $region25
    $region24: #{tpu_custom_call.1} parent=1 // pred_region
      _
    $region25: #{tpu_custom_call.1} parent=1 // pred_fallthru
      _
    // Predicated region
    $region26: #{tpu_custom_call.1} parent=1 // pred_check
      _
    $region27: #{tpu_custom_call.1} parent=1 // pred_check_branch
      %49 = sbr.rel (0) target = $region29
    $region28: #{tpu_custom_call.1} parent=1 // pred_region
      _
    $region29: #{tpu_custom_call.1} parent=1 // pred_fallthru
      _
    // Predicated region
    $region30: #{tpu_custom_call.1} parent=1 // pred_check
      _
    $region31: #{tpu_custom_call.1} parent=1 // pred_check_branch
      %51 = sbr.rel (0) target = $region33
    $region32: #{tpu_custom_call.1} parent=1 // pred_region
      _
    $region33: #{tpu_custom_call.1} parent=1 // pred_fallthru
      _
    // Predicated region
    $region34: #{tpu_custom_call.1} parent=1 // pred_check
      _
    $region35: #{tpu_custom_call.1} parent=1 // pred_check_branch
      %53 = sbr.rel (0) target = $region37
    $region36: #{tpu_custom_call.1} parent=1 // pred_region
      %54 = dma.done [#allocation3], 2048
    $region37: #{tpu_custom_call.1} parent=1 // pred_fallthru
      _
    // Predicated region
    $region38: #{tpu_custom_call.1} parent=1 // pred_check
      _
    $region39: #{tpu_custom_call.1} parent=1 // pred_check_branch
      %56 = sbr.rel (0) target = $region41
    $region40: #{tpu_custom_call.1} parent=1 // pred_region
      %57 = dma.done [#allocation6], 2048
    $region41: #{tpu_custom_call.1} parent=1 // pred_fallthru
      _
    %v58 = vld [vmem:[%s0] sm:$0xff]
    %v59 = vld [vmem:[%s0 + $0x8] sm:$0xff]
    %v60 = vld [vmem:[%s0 + $0x10] sm:$0xff]
    %v61 = vld [vmem:[%s4] sm:$0x3]
    %v62 = vld [vmem:[%s1] sm:$0xff]
    %v63 = vld [vmem:[%s1 + $0x8] sm:$0xff]
    %v64 = vlaneseq
    %v65 = vshrl.u32 %v64, 7
    %v66 = vsub.s32 0, %v65
    %v67 = vrot.slane %v61, %v66
    %vm68 = vcmask 130048
    %v70 = vsel %vm68, %v58, 0
    %v73 = vsel %vm68, %v59, 0
    %v76 = vsel %vm68, %v60, 0
    %78 = vmatprep.subr.mxu0 0.0
    %79 = vmatpush1.msra.mxu0 0.0
    %80 = vmatprep.subr.mxu0 0.0
    %81 = vmatpush1.msra.mxu0 0.0
    %82 = vmatprep.subr.mxu0 0.0
    %83 = vmatpush1.msra.mxu0 0.0
    %84 = vmatprep.subr.mxu0 0.0
    %85 = vmatpush1.msra.mxu0 0.0
    %86 = vmatprep.subr.mxu0 0.0
    %87 = vmatpush1.msra.mxu0 0.0
    %88 = vmatprep.subr.mxu0 0.0
    %89 = vmatpush1.msra.mxu0 0.0
    %90 = vmatprep.subr.mxu0 0.0
    %91 = vmatpush1.msra.mxu0 0.0
    %92 = vmatprep.subr.mxu0 0.0
    %93 = vmatpush1.msra.mxu0 0.0
    %94 = vmatprep.subr.mxu0 0.0
    %95 = vmatpush1.msra.mxu0 0.0
    %96 = vmatprep.subr.mxu0 0.0
    %97 = vmatpush1.msra.mxu0 0.0
    %98 = vmatprep.subr.mxu0 0.0
    %99 = vmatpush1.msra.mxu0 0.0
    %100 = vmatprep.subr.mxu0 0.0
    %101 = vmatpush1.msra.mxu0 0.0
    %102 = vmatprep.subr.mxu0 0.0
    %103 = vmatpush1.msra.mxu0 0.0
    %104 = vmatprep.subr.mxu0 0.0
    %105 = vmatpush1.msra.mxu0 0.0
    %106 = vmatprep.subr.mxu0 0.0
    %107 = vmatpush1.msra.mxu0 %v63
    %108 = vmatprep.subr.mxu0 0.0
    %109 = vmatpush1.msra.mxu0 %v62
    %110 = vmatprep.subr.mxu0 0.0
    %111 = vmatpush2.msra.mxu0 0.0
    %112 = vmatprep.subr.mxu0 0.0
    %113 = vmatpush2.msra.mxu0 0.0
    %114 = vmatprep.subr.mxu0 0.0
    %115 = vmatpush2.msra.mxu0 0.0
    %116 = vmatprep.subr.mxu0 0.0
    %117 = vmatpush2.msra.mxu0 0.0
    %118 = vmatprep.subr.mxu0 0.0
    %119 = vmatpush2.msra.mxu0 0.0
    %120 = vmatprep.subr.mxu0 0.0
    %121 = vmatpush2.msra.mxu0 0.0
    %122 = vmatprep.subr.mxu0 0.0
    %123 = vmatpush2.msra.mxu0 0.0
    %124 = vmatprep.subr.mxu0 0.0
    %125 = vmatpush2.msra.mxu0 0.0
    %126 = vmatprep.subr.mxu0 0.0
    %127 = vmatpush2.msra.mxu0 0.0
    %128 = vmatprep.subr.mxu0 0.0
    %129 = vmatpush2.msra.mxu0 0.0
    %130 = vmatprep.subr.mxu0 0.0
    %131 = vmatpush2.msra.mxu0 0.0
    %132 = vmatprep.subr.mxu0 0.0
    %133 = vmatpush2.msra.mxu0 0.0
    %134 = vmatprep.subr.mxu0 0.0
    %135 = vmatpush2.msra.mxu0 0.0
    %136 = vmatprep.subr.mxu0 0.0
    %137 = vmatpush2.msra.mxu0 0.0
    %138 = vmatprep.subr.mxu0 0.0
    %139 = vmatpush2.msra.mxu0 0.0
    %140 = vmatprep.subr.mxu0 0.0
    %141 = vmatpush2.msra.mxu0 0.0
    %142 = vmatprep.mubr.f32.mxu0 0.0
    %143 = vmatmul.mubr.f32.gmra.mxu0 %v70
    %v144 = vpop.f32.mrf.mxu0
    %v145 = vadd.f32 %v67, %v144
    %v146 = vpop.f32.mrf.mxu0
    %147 = vmatprep.mubr.f32.mxu0 0.0
    %148 = vmatmul.mubr.f32.gmra.mxu0 %v73
    %v149 = vpop.f32.mrf.mxu0
    %v150 = vadd.f32 %v67, %v149
    %v151 = vpop.f32.mrf.mxu0
    %152 = vmatprep.mubr.f32.mxu0 0.0
    %153 = vmatmul.mubr.f32.gmra.mxu0 %v76
    %v154 = vpop.f32.mrf.mxu0
    %v155 = vadd.f32 %v67, %v154
    %v156 = vpop.f32.mrf.mxu0
    %157 = vdwg.mxu0
    %v158 = vmax.f32 %v145, 0.0
    %v159 = vmax.f32 %v150, 0.0
    %v160 = vmax.f32 %v155, 0.0
    %v161 = vld [vmem:[#allocation2] sm:$0xff]
    %v162 = vld [vmem:[#allocation2 + $0x8] sm:$0xff]
    %v163 = vld [vmem:[#allocation2 + $0x10] sm:$0xff]
    %v164 = vld [vmem:[#allocation2 + $0x18] sm:$0xff]
    %v165 = vld [vmem:[#allocation2 + $0x20] sm:$0xff]
    %v166 = vld [vmem:[#allocation2 + $0x28] sm:$0xff]
    %v167 = vld [vmem:[#allocation2 + $0x30] sm:$0xff]
    %v168 = vld [vmem:[#allocation2 + $0x38] sm:$0xff]
    %v169 = vld [vmem:[#allocation2 + $0x40] sm:$0xff]
    %v170 = vld [vmem:[#allocation2 + $0x48] sm:$0xff]
    %v171 = vld [vmem:[#allocation2 + $0x50] sm:$0xff]
    %v172 = vld [vmem:[#allocation2 + $0x58] sm:$0xff]
    %v173 = vld [vmem:[#allocation2 + $0x60] sm:$0xff]
    %v174 = vld [vmem:[#allocation2 + $0x68] sm:$0xff]
    %v175 = vld [vmem:[#allocation2 + $0x70] sm:$0xff]
    %v176 = vld [vmem:[#allocation2 + $0x78] sm:$0xff]
    %v177 = vlaneseq
    %v178 = vshrl.u32 %v177, 7
    %v179 = vsub.s32 1, %v178
    %v180 = vrot.slane %v61, %v179
    %181 = vmatprep.subr.mxu0 0.0
    %182 = vmatpush1.msra.mxu0 %v176
    %183 = vmatprep.subr.mxu0 0.0
    %184 = vmatpush1.msra.mxu0 %v175
    %185 = vmatprep.subr.mxu0 0.0
    %186 = vmatpush1.msra.mxu0 %v174
    %187 = vmatprep.subr.mxu0 0.0
    %188 = vmatpush1.msra.mxu0 %v173
    %189 = vmatprep.subr.mxu0 0.0
    %190 = vmatpush1.msra.mxu0 %v172
    %191 = vmatprep.subr.mxu0 0.0
    %192 = vmatpush1.msra.mxu0 %v171
    %193 = vmatprep.subr.mxu0 0.0
    %194 = vmatpush1.msra.mxu0 %v170
    %195 = vmatprep.subr.mxu0 0.0
    %196 = vmatpush1.msra.mxu0 %v169
    %197 = vmatprep.subr.mxu0 0.0
    %198 = vmatpush1.msra.mxu0 %v168
    %199 = vmatprep.subr.mxu0 0.0
    %200 = vmatpush1.msra.mxu0 %v167
    %201 = vmatprep.subr.mxu0 0.0
    %202 = vmatpush1.msra.mxu0 %v166
    %203 = vmatprep.subr.mxu0 0.0
    %204 = vmatpush1.msra.mxu0 %v165
    %205 = vmatprep.subr.mxu0 0.0
    %206 = vmatpush1.msra.mxu0 %v164
    %207 = vmatprep.subr.mxu0 0.0
    %208 = vmatpush1.msra.mxu0 %v163
    %209 = vmatprep.subr.mxu0 0.0
    %210 = vmatpush1.msra.mxu0 %v162
    %211 = vmatprep.subr.mxu0 0.0
    %212 = vmatpush1.msra.mxu0 %v161
    %213 = vmatprep.subr.mxu0 0.0
    %214 = vmatpush2.msra.mxu0 0.0
    %215 = vmatprep.subr.mxu0 0.0
    %216 = vmatpush2.msra.mxu0 0.0
    %217 = vmatprep.subr.mxu0 0.0
    %218 = vmatpush2.msra.mxu0 0.0
    %219 = vmatprep.subr.mxu0 0.0
    %220 = vmatpush2.msra.mxu0 0.0
    %221 = vmatprep.subr.mxu0 0.0
    %222 = vmatpush2.msra.mxu0 0.0
    %223 = vmatprep.subr.mxu0 0.0
    %224 = vmatpush2.msra.mxu0 0.0
    %225 = vmatprep.subr.mxu0 0.0
    %226 = vmatpush2.msra.mxu0 0.0
    %227 = vmatprep.subr.mxu0 0.0
    %228 = vmatpush2.msra.mxu0 0.0
    %229 = vmatprep.subr.mxu0 0.0
    %230 = vmatpush2.msra.mxu0 0.0
    %231 = vmatprep.subr.mxu0 0.0
    %232 = vmatpush2.msra.mxu0 0.0
    %233 = vmatprep.subr.mxu0 0.0
    %234 = vmatpush2.msra.mxu0 0.0
    %235 = vmatprep.subr.mxu0 0.0
    %236 = vmatpush2.msra.mxu0 0.0
    %237 = vmatprep.subr.mxu0 0.0
    %238 = vmatpush2.msra.mxu0 0.0
    %239 = vmatprep.subr.mxu0 0.0
    %240 = vmatpush2.msra.mxu0 0.0
    %241 = vmatprep.subr.mxu0 0.0
    %242 = vmatpush2.msra.mxu0 0.0
    %243 = vmatprep.subr.mxu0 0.0
    %244 = vmatpush2.msra.mxu0 0.0
    %245 = vmatprep.mubr.f32.mxu0 0.0
    %246 = vmatmul.mubr.f32.gmra.mxu0 %v158
    %v247 = vpop.f32.mrf.mxu0
    %v248 = vadd.f32 %v180, %v247
    %v249 = vpop.f32.mrf.mxu0
    %250 = vmatprep.mubr.f32.mxu0 0.0
    %251 = vmatmul.mubr.f32.gmra.mxu0 %v159
    %v252 = vpop.f32.mrf.mxu0
    %v253 = vadd.f32 %v180, %v252
    %v254 = vpop.f32.mrf.mxu0
    %255 = vmatprep.mubr.f32.mxu0 0.0
    %256 = vmatmul.mubr.f32.gmra.mxu0 %v160
    %v257 = vpop.f32.mrf.mxu0
    %v258 = vadd.f32 %v180, %v257
    %v259 = vpop.f32.mrf.mxu0
    %260 = vdwg.mxu0
    %v261 = vmax.f32 %v248, 0.0
    %v262 = vmax.f32 %v253, 0.0
    %v263 = vmax.f32 %v258, 0.0
    %v264 = vld [vmem:[#allocation5] sm:$0xff]
    %v265 = vld [vmem:[#allocation5 + $0x8] sm:$0xff]
    %v266 = vld [vmem:[#allocation5 + $0x10] sm:$0xff]
    %v267 = vld [vmem:[#allocation5 + $0x18] sm:$0xff]
    %v268 = vld [vmem:[#allocation5 + $0x20] sm:$0xff]
    %v269 = vld [vmem:[#allocation5 + $0x28] sm:$0xff]
    %v270 = vld [vmem:[#allocation5 + $0x30] sm:$0xff]
    %v271 = vld [vmem:[#allocation5 + $0x38] sm:$0xff]
    %v272 = vld [vmem:[#allocation5 + $0x40] sm:$0xff]
    %v273 = vld [vmem:[#allocation5 + $0x48] sm:$0xff]
    %v274 = vld [vmem:[#allocation5 + $0x50] sm:$0xff]
    %v275 = vld [vmem:[#allocation5 + $0x58] sm:$0xff]
    %v276 = vld [vmem:[#allocation5 + $0x60] sm:$0xff]
    %v277 = vld [vmem:[#allocation5 + $0x68] sm:$0xff]
    %v278 = vld [vmem:[#allocation5 + $0x70] sm:$0xff]
    %v279 = vld [vmem:[#allocation5 + $0x78] sm:$0xff]
    %v280 = vld [vmem:[%s5] sm:$0x1]
    %v282 = vlaneseq
    %v283 = vshrl.u32 %v282, 7
    %v284 = vsub.s32 0, %v283
    %v285 = vrot.slane %v280, %v284
    %287 = vmatprep.subr.mxu0 0.0
    %288 = vmatpush1.msra.mxu0 %v279
    %289 = vmatprep.subr.mxu0 0.0
    %290 = vmatpush1.msra.mxu0 %v278
    %291 = vmatprep.subr.mxu0 0.0
    %292 = vmatpush1.msra.mxu0 %v277
    %293 = vmatprep.subr.mxu0 0.0
    %294 = vmatpush1.msra.mxu0 %v276
    %295 = vmatprep.subr.mxu0 0.0
    %296 = vmatpush1.msra.mxu0 %v275
    %297 = vmatprep.subr.mxu0 0.0
    %298 = vmatpush1.msra.mxu0 %v274
    %299 = vmatprep.subr.mxu0 0.0
    %300 = vmatpush1.msra.mxu0 %v273
    %301 = vmatprep.subr.mxu0 0.0
    %302 = vmatpush1.msra.mxu0 %v272
    %303 = vmatprep.subr.mxu0 0.0
    %304 = vmatpush1.msra.mxu0 %v271
    %305 = vmatprep.subr.mxu0 0.0
    %306 = vmatpush1.msra.mxu0 %v270
    %307 = vmatprep.subr.mxu0 0.0
    %308 = vmatpush1.msra.mxu0 %v269
    %309 = vmatprep.subr.mxu0 0.0
    %310 = vmatpush1.msra.mxu0 %v268
    %311 = vmatprep.subr.mxu0 0.0
    %312 = vmatpush1.msra.mxu0 %v267
    %313 = vmatprep.subr.mxu0 0.0
    %314 = vmatpush1.msra.mxu0 %v266
    %315 = vmatprep.subr.mxu0 0.0
    %316 = vmatpush1.msra.mxu0 %v265
    %317 = vmatprep.subr.mxu0 0.0
    %318 = vmatpush1.msra.mxu0 %v264
    %319 = vmatprep.subr.mxu0 0.0
    %320 = vmatpush2.msra.mxu0 0.0
    %321 = vmatprep.subr.mxu0 0.0
    %322 = vmatpush2.msra.mxu0 0.0
    %323 = vmatprep.subr.mxu0 0.0
    %324 = vmatpush2.msra.mxu0 0.0
    %325 = vmatprep.subr.mxu0 0.0
    %326 = vmatpush2.msra.mxu0 0.0
    %327 = vmatprep.subr.mxu0 0.0
    %328 = vmatpush2.msra.mxu0 0.0
    %329 = vmatprep.subr.mxu0 0.0
    %330 = vmatpush2.msra.mxu0 0.0
    %331 = vmatprep.subr.mxu0 0.0
    %332 = vmatpush2.msra.mxu0 0.0
    %333 = vmatprep.subr.mxu0 0.0
    %334 = vmatpush2.msra.mxu0 0.0
    %335 = vmatprep.subr.mxu0 0.0
    %336 = vmatpush2.msra.mxu0 0.0
    %337 = vmatprep.subr.mxu0 0.0
    %338 = vmatpush2.msra.mxu0 0.0
    %339 = vmatprep.subr.mxu0 0.0
    %340 = vmatpush2.msra.mxu0 0.0
    %341 = vmatprep.subr.mxu0 0.0
    %342 = vmatpush2.msra.mxu0 0.0
    %343 = vmatprep.subr.mxu0 0.0
    %344 = vmatpush2.msra.mxu0 0.0
    %345 = vmatprep.subr.mxu0 0.0
    %346 = vmatpush2.msra.mxu0 0.0
    %347 = vmatprep.subr.mxu0 0.0
    %348 = vmatpush2.msra.mxu0 0.0
    %349 = vmatprep.subr.mxu0 0.0
    %350 = vmatpush2.msra.mxu0 0.0
    %351 = vmatprep.mubr.f32.mxu0 0.0
    %352 = vmatmul.mubr.f32.gmra.mxu0 %v261
    %v353 = vpop.f32.mrf.mxu0
    %v354 = vadd.f32 %v285, %v353
    %v355 = vpop.f32.mrf.mxu0
    %356 = vmatprep.mubr.f32.mxu0 0.0
    %357 = vmatmul.mubr.f32.gmra.mxu0 %v262
    %v358 = vpop.f32.mrf.mxu0
    %v359 = vadd.f32 %v285, %v358
    %v360 = vpop.f32.mrf.mxu0
    %361 = vmatprep.mubr.f32.mxu0 0.0
    %362 = vmatmul.mubr.f32.gmra.mxu0 %v263
    %v363 = vpop.f32.mrf.mxu0
    %v364 = vadd.f32 %v285, %v363
    %v365 = vpop.f32.mrf.mxu0
    %366 = vdwg.mxu0
    %v367 = vld [vmem:[%s6] sm:$0x1]
    %v369 = vlaneseq
    %v370 = vshrl.u32 %v369, 7
    %v371 = vsub.s32 0, %v370
    %v372 = vrot.slane %v367, %v371
    %v374 = vmax.f32 %v354, %v372
    %v375 = vmax.f32 %v359, %v372
    %v376 = vmax.f32 %v364, %v372
    %v377 = vld [vmem:[%s7] sm:$0x1]
    %v379 = vlaneseq
    %v380 = vshrl.u32 %v379, 7
    %v381 = vsub.s32 0, %v380
    %v382 = vrot.slane %v377, %v381
    %v384 = vmin.f32 %v374, %v382
    %v385 = vmin.f32 %v375, %v382
    %v386 = vmin.f32 %v376, %v382
    %387 = vst [vmem:[#allocation7] sm:$0xff] %v384
    %388 = vst [vmem:[#allocation7 + $0x8] sm:$0xff] %v385
    %389 = vst [vmem:[#allocation7 + $0x10] sm:$0xff] %v386
    // Predicated region
    $region42: #{tpu_custom_call.1} parent=1 // pred_check
      _
    $region43: #{tpu_custom_call.1} parent=1 // pred_check_branch
      %391 = sbr.rel (0) target = $region45
    $region44: #{tpu_custom_call.1} parent=1 // pred_region
      %s393 = ssub.s32 384, 384
      %394 = vsyncadd [#allocation4], %s393
      %s395 = sshll.u32 [#allocation7], 4
      %s396 = int_to_ptr.vmem [resolvable:$true] %s395
      %401 = dma.vmem_to_hbm [thread:$0]  %s396, 384, %s8, [#allocation4], 128, 128, 8
    $region45: #{tpu_custom_call.1} parent=1 // pred_fallthru
      _
    // Predicated region
    $region46: #{tpu_custom_call.1} parent=1 // pred_check
      _
    $region47: #{tpu_custom_call.1} parent=1 // pred_check_branch
      %403 = sbr.rel (0) target = $region49
    $region48: #{tpu_custom_call.1} parent=1 // pred_region
      %404 = dma.done [#allocation4], 384
    $region49: #{tpu_custom_call.1} parent=1 // pred_fallthru
      _
    %405 = vsyncpa [#allocation3], 1
    %406 = vsyncpa [#allocation6], 1
    %407 = vsyncpa [#allocation4], 1

</llo_original>
